<compile_context>
chip_gen: v7x
topology: tpu7x:2x2x1
jax: 0.10.0
libtpu: 0.0.40
codegen_flags: <defaults>
</compile_context>

<pallas_src>
import jax
import jax.numpy as jnp
from jax import lax
from jax.experimental import pallas as pl
from jax.experimental.pallas import tpu as pltpu


def _round_up(x, m):
    return ((x + m - 1) // m) * m


def decoder_kernel(li_ref, di_ref,            # [tb, 1] int32 index tiles (VMEM)
                   lnc_tab_ref, dis_tab_ref,  # VMEM-resident feature tables
                   wcat_ref,                  # [D, C*D] folded weights (resident)
                   sel_ref,                   # [C*D, C_pad] selection matrix (resident)
                   out_ref):                  # [tb, C_pad] lane-dense output
    tb = out_ref.shape[0]
    n_lnc = lnc_tab_ref.shape[0]
    n_dis = dis_tab_ref.shape[0]
    D = lnc_tab_ref.shape[1]
    num_classes = wcat_ref.shape[1] // D

    li = li_ref[...]   # [tb, 1] int32
    di = di_ref[...]   # [tb, 1] int32

    # ---- vectorized one-hot gather on the MXU (replaces the serial row loop).
    onehot_l = (li == lax.broadcasted_iota(jnp.int32, (tb, n_lnc), 1)).astype(jnp.float32)
    onehot_d = (di == lax.broadcasted_iota(jnp.int32, (tb, n_dis), 1)).astype(jnp.float32)
    lnc = jnp.dot(onehot_l, lnc_tab_ref[...], preferred_element_type=jnp.float32)  # [tb, D]
    dis = jnp.dot(onehot_d, dis_tab_ref[...], preferred_element_type=jnp.float32)  # [tb, D]

    # ---- fused bilinear + classifier: single [tb,D] @ [D,C*D] MXU matmul.
    u = jnp.dot(lnc, wcat_ref[...], preferred_element_type=jnp.float32)            # [tb, C*D]
    prod = u * jnp.concatenate([dis] * num_classes, axis=1)                        # [tb, C*D]

    # ---- per-class segment sum on the MXU via the constant selection matrix,
    # yielding a lane-dense [tb, C_pad] result ready for an unmasked store.
    out = jnp.dot(prod, sel_ref[...], preferred_element_type=jnp.float32)          # [tb, C_pad]
    out_ref[...] = jnp.maximum(out, 0.0)  # activation = F.relu


def decoder_forward(lnc_inputs, dis_inputs, lnc_indices, dis_indices,
                    weight, weight_classifier, *, block_rows=None):
    """Matches Decoder.forward with dropout p=0.0 (identity)."""
    lnc_inputs = jnp.asarray(lnc_inputs, jnp.float32)
    dis_inputs = jnp.asarray(dis_inputs, jnp.float32)
    weight = jnp.asarray(weight, jnp.float32)
    weight_classifier = jnp.asarray(weight_classifier, jnp.float32)

    B = lnc_indices.shape[0]
    n_lnc, D = lnc_inputs.shape
    n_dis = dis_inputs.shape[0]
    num_classes = weight_classifier.shape[1]

    # ---- fold classifier into bilinear weights (exact; ReLU comes after),
    # then lay them out lane-contiguously: Wcat[d, c*D + e] = W_eff[c, d, e].
    w_eff = jnp.einsum("wde,wc->cde", weight, weight_classifier)      # [C, D, D]
    wcat = jnp.transpose(w_eff, (1, 0, 2)).reshape(D, num_classes * D)

    # ---- constant per-class selection matrix for the MXU segment-sum;
    # output is padded to 128 lanes so the store is lane-dense/unmasked.
    c_pad = 128
    sel = (jnp.arange(num_classes * D)[:, None] // D
           == jnp.arange(c_pad)[None, :]).astype(jnp.float32)         # [C*D, C_pad]

    # ---- pad the feature tables to 8-row multiples (sublane aligned);
    # padded rows are never selected by a valid index.
    n_lnc_p = _round_up(n_lnc, 8)
    n_dis_p = _round_up(n_dis, 8)
    lnc_tab = jnp.pad(lnc_inputs, ((0, n_lnc_p - n_lnc), (0, 0)))
    dis_tab = jnp.pad(dis_inputs, ((0, n_dis_p - n_dis), (0, 0)))

    # ---- batch tiling: one grid step for small B, 512-row tiles for large B
    # (multi-step grids shard across TensorCores on v7x via "parallel").
    if block_rows is None:
        block_rows = _round_up(B, 8) if B <= 512 else 512
    tb = block_rows
    b_pad = _round_up(B, tb)
    pad = b_pad - B
    li = jnp.pad(lnc_indices.astype(jnp.int32), (0, pad)).reshape(b_pad, 1)
    di = jnp.pad(dis_indices.astype(jnp.int32), (0, pad)).reshape(b_pad, 1)

    out = pl.pallas_call(
        decoder_kernel,
        out_shape=jax.ShapeDtypeStruct((b_pad, c_pad), jnp.float32),
        grid_spec=pltpu.PrefetchScalarGridSpec(
            num_scalar_prefetch=0,
            grid=(b_pad // tb,),
            in_specs=[
                # Per-tile index blocks (scale to any B, no SMEM ceiling).
                pl.BlockSpec((tb, 1), lambda i: (i, 0)),
                pl.BlockSpec((tb, 1), lambda i: (i, 0)),
                # Full tables / folded weights / selection matrix: constant
                # index_map => DMA'd once, resident in VMEM across grid steps.
                pl.BlockSpec((n_lnc_p, D), lambda i: (0, 0)),
                pl.BlockSpec((n_dis_p, D), lambda i: (0, 0)),
                pl.BlockSpec((D, num_classes * D), lambda i: (0, 0)),
                pl.BlockSpec((num_classes * D, c_pad), lambda i: (0, 0)),
            ],
            out_specs=pl.BlockSpec((tb, c_pad), lambda i: (i, 0)),
        ),
        compiler_params=pltpu.CompilerParams(
            dimension_semantics=("parallel",)),
    )(li, di, lnc_tab, dis_tab, wcat, sel)

    return out[:B, :num_classes]


def _kaiming_uniform(key, shape):
    # torch.nn.init.kaiming_uniform_ defaults: bound = sqrt(6 / fan_in),
    # fan_in = shape[1] * prod(shape[2:]).
    fan_in = shape[1]
    for d in shape[2:]:
        fan_in *= d
    bound = (6.0 / fan_in) ** 0.5
    return jax.random.uniform(key, shape, jnp.float32, -bound, bound)


if __name__ == "__main__":
    key = jax.random.PRNGKey(0)
    k_w, k_wc, k_lnc, k_dis, k_il, k_id = jax.random.split(key, 6)

    input_dim = 32     # D (embedding dim)
    num_weights = 4
    num_classes = 2
    n_lnc, n_dis = 16, 12
    batch = 8          # number of (lnc, dis) pairs scored

    weight = _kaiming_uniform(k_w, (num_weights, input_dim, input_dim))
    weight_classifier = _kaiming_uniform(k_wc, (num_weights, num_classes))

    lnc_inputs = jax.random.normal(k_lnc, (n_lnc, input_dim), jnp.float32)
    dis_inputs = jax.random.normal(k_dis, (n_dis, input_dim), jnp.float32)
    lnc_indices = jax.random.randint(k_il, (batch,), 0, n_lnc)
    dis_indices = jax.random.randint(k_id, (batch,), 0, n_dis)

    out = decoder_forward(lnc_inputs, dis_inputs, lnc_indices, dis_indices,
                          weight, weight_classifier)
    jax.block_until_ready(out)

    # Pure-JAX reference in the *original* (unfolded) formulation.
    lnc_sel = lnc_inputs[lnc_indices]
    dis_sel = dis_inputs[dis_indices]
    basis = jnp.einsum("bd,wde,be->bw", lnc_sel, weight, dis_sel)
    ref = jnp.maximum(basis @ weight_classifier, 0.0)

    assert out.shape == (batch, num_classes)
    assert jnp.allclose(out, ref, atol=1e-4, rtol=1e-4)

    print("KERNEL_OK")
</pallas_src>

<mosaic_0001>
module attributes {stable_mosaic.version = 11 : i64} {
  func.func @decoder_kernel(%arg0: i32, %arg1: memref<8x1xi32, #tpu.memory_space<vmem>>, %arg2: memref<8x1xi32, #tpu.memory_space<vmem>>, %arg3: memref<16x32xf32, #tpu.memory_space<vmem>>, %arg4: memref<16x32xf32, #tpu.memory_space<vmem>>, %arg5: memref<32x64xf32, #tpu.memory_space<vmem>>, %arg6: memref<64x128xf32, #tpu.memory_space<vmem>>, %arg7: memref<8x128xf32, #tpu.memory_space<vmem>>) attributes {dimension_semantics = [#tpu.dimension_semantics<parallel>], iteration_bounds = array<i64: 1>, scalar_prefetch = 0 : i64, scratch_operands = 0 : i64, tpu.core_type = #tpu.core_type<tc>, window_params = [{transform_indices = @transform_0, window_bounds = array<i64: 8, 1>}, {transform_indices = @transform_1, window_bounds = array<i64: 8, 1>}, {pipeline_mode = #tpu.pipeline_mode<synchronous>, transform_indices = @transform_2, window_bounds = array<i64: 16, 32>}, {pipeline_mode = #tpu.pipeline_mode<synchronous>, transform_indices = @transform_3, window_bounds = array<i64: 16, 32>}, {pipeline_mode = #tpu.pipeline_mode<synchronous>, transform_indices = @transform_4, window_bounds = array<i64: 32, 64>}, {pipeline_mode = #tpu.pipeline_mode<synchronous>, transform_indices = @transform_5, window_bounds = array<i64: 64, 128>}, {transform_indices = @transform_6, window_bounds = array<i64: 8, 128>}]} {
    %c0 = arith.constant 0 : index
    %c0_0 = arith.constant 0 : index
    %0 = vector.load %arg1[%c0, %c0_0] : memref<8x1xi32, #tpu.memory_space<vmem>>, vector<8x1xi32>
    %c0_1 = arith.constant 0 : index
    %c0_2 = arith.constant 0 : index
    %1 = vector.load %arg2[%c0_1, %c0_2] : memref<8x1xi32, #tpu.memory_space<vmem>>, vector<8x1xi32>
    %2 = tpu.iota {dimensions = array<i32: 1>} : vector<8x16xi32>
    %3 = vector.broadcast %0 : vector<8x1xi32> to vector<8x16xi32>
    %4 = arith.cmpi eq, %3, %2 : vector<8x16xi32>
    %5 = arith.extui %4 : vector<8x16xi1> to vector<8x16xi32>
    %6 = arith.sitofp %5 : vector<8x16xi32> to vector<8x16xf32>
    %7 = tpu.iota {dimensions = array<i32: 1>} : vector<8x16xi32>
    %8 = vector.broadcast %1 : vector<8x1xi32> to vector<8x16xi32>
    %9 = arith.cmpi eq, %8, %7 : vector<8x16xi32>
    %10 = arith.extui %9 : vector<8x16xi1> to vector<8x16xi32>
    %11 = arith.sitofp %10 : vector<8x16xi32> to vector<8x16xf32>
    %c0_3 = arith.constant 0 : index
    %c0_4 = arith.constant 0 : index
    %12 = vector.load %arg3[%c0_3, %c0_4] : memref<16x32xf32, #tpu.memory_space<vmem>>, vector<16x32xf32>
    %cst = arith.constant dense<0.000000e+00> : vector<8x32xf32>
    %13 = tpu.matmul %6, %12, %cst {dimension_numbers = #tpu.dot_dimension_numbers<[1], [0], [0], [1], [0, 0, 1, 1], [], []>} : vector<8x16xf32>, vector<16x32xf32>, vector<8x32xf32> -> vector<8x32xf32>
    %c0_5 = arith.constant 0 : index
    %c0_6 = arith.constant 0 : index
    %14 = vector.load %arg4[%c0_5, %c0_6] : memref<16x32xf32, #tpu.memory_space<vmem>>, vector<16x32xf32>
    %cst_7 = arith.constant dense<0.000000e+00> : vector<8x32xf32>
    %15 = tpu.matmul %11, %14, %cst_7 {dimension_numbers = #tpu.dot_dimension_numbers<[1], [0], [0], [1], [0, 0, 1, 1], [], []>} : vector<8x16xf32>, vector<16x32xf32>, vector<8x32xf32> -> vector<8x32xf32>
    %c0_8 = arith.constant 0 : index
    %c0_9 = arith.constant 0 : index
    %16 = vector.load %arg5[%c0_8, %c0_9] : memref<32x64xf32, #tpu.memory_space<vmem>>, vector<32x64xf32>
    %cst_10 = arith.constant dense<0.000000e+00> : vector<8x64xf32>
    %17 = tpu.matmul %13, %16, %cst_10 {dimension_numbers = #tpu.dot_dimension_numbers<[1], [0], [0], [1], [0, 0, 1, 1], [], []>} : vector<8x32xf32>, vector<32x64xf32>, vector<8x64xf32> -> vector<8x64xf32>
    %18 = tpu.concatenate %15, %15 in 1 : vector<8x32xf32>, vector<8x32xf32> -> vector<8x64xf32>
    %19 = arith.mulf %17, %18 : vector<8x64xf32>
    %c0_11 = arith.constant 0 : index
    %c0_12 = arith.constant 0 : index
    %20 = vector.load %arg6[%c0_11, %c0_12] : memref<64x128xf32, #tpu.memory_space<vmem>>, vector<64x128xf32>
    %cst_13 = arith.constant dense<0.000000e+00> : vector<8x128xf32>
    %21 = tpu.matmul %19, %20, %cst_13 {dimension_numbers = #tpu.dot_dimension_numbers<[1], [0], [0], [1], [0, 0, 1, 1], [], []>} : vector<8x64xf32>, vector<64x128xf32>, vector<8x128xf32> -> vector<8x128xf32>
    %cst_14 = arith.constant 0.000000e+00 : f32
    %22 = vector.broadcast %cst_14 : f32 to vector<8x128xf32>
    %23 = arith.maximumf %21, %22 : vector<8x128xf32>
    %c0_15 = arith.constant 0 : index
    %c0_16 = arith.constant 0 : index
    %24 = vector.load %arg7[%c0_15, %c0_16] : memref<8x128xf32, #tpu.memory_space<vmem>>, vector<8x128xf32>
    tpu.vector_store %arg7[%c0_15, %c0_16], %23 {strides = array<i32>} : memref<8x128xf32, #tpu.memory_space<vmem>>, vector<8x128xf32>,
    return
  }
  func.func @transform_0(%arg0: i32) -> (i32, i32) {
    %c0_i32 = arith.constant 0 : i32
    %c0_i32_0 = arith.constant 0 : i32
    return %arg0, %c0_i32 : i32, i32
  }
  func.func @transform_1(%arg0: i32) -> (i32, i32) {
    %c0_i32 = arith.constant 0 : i32
    %c0_i32_0 = arith.constant 0 : i32
    return %arg0, %c0_i32 : i32, i32
  }
  func.func @transform_2(%arg0: i32) -> (i32, i32) {
    %c0_i32 = arith.constant 0 : i32
    %c0_i32_0 = arith.constant 0 : i32
    %c0_i32_1 = arith.constant 0 : i32
    return %c0_i32, %c0_i32_0 : i32, i32
  }
  func.func @transform_3(%arg0: i32) -> (i32, i32) {
    %c0_i32 = arith.constant 0 : i32
    %c0_i32_0 = arith.constant 0 : i32
    %c0_i32_1 = arith.constant 0 : i32
    return %c0_i32, %c0_i32_0 : i32, i32
  }
  func.func @transform_4(%arg0: i32) -> (i32, i32) {
    %c0_i32 = arith.constant 0 : i32
    %c0_i32_0 = arith.constant 0 : i32
    %c0_i32_1 = arith.constant 0 : i32
    return %c0_i32, %c0_i32_0 : i32, i32
  }
  func.func @transform_5(%arg0: i32) -> (i32, i32) {
    %c0_i32 = arith.constant 0 : i32
    %c0_i32_0 = arith.constant 0 : i32
    %c0_i32_1 = arith.constant 0 : i32
    return %c0_i32, %c0_i32_0 : i32, i32
  }
  func.func @transform_6(%arg0: i32) -> (i32, i32) {
    %c0_i32 = arith.constant 0 : i32
    %c0_i32_0 = arith.constant 0 : i32
    return %arg0, %c0_i32 : i32, i32
  }
}

</mosaic_0001>

<llo_original>
// kernel: tpu_custom_call.1
$region0: #{tpu_custom_call.1}
  #allocation0 [shape = 'u32[]', space=smem, size = 0x4, offset = 0x4, fixed_abs, tag = 'smem constant byte address 0x4 - core index']
  #allocation1 [shape = 'u32[144,128]{1,0:T(1,128)}', space=vmem, size = 0x12000, scoped, tag = 'internal scratch']
  %s0 = inlined_call_operand.vmem [shape: s32[8,1], index: 0, kind: input, shape index: {}]
  %s1 = inlined_call_operand.vmem [shape: s32[8,1], index: 1, kind: input, shape index: {}]
  %s2 = inlined_call_operand.hbm [shape: f32[16,32], index: 2, kind: input, shape index: {}]
  %s3 = inlined_call_operand.hbm [shape: f32[16,32], index: 3, kind: input, shape index: {}]
  %s4 = inlined_call_operand.vmem [shape: f32[32,64], index: 4, kind: input, shape index: {}]
  %s5 = inlined_call_operand.hbm [shape: f32[64,128], index: 5, kind: input, shape index: {}]
  %s6 = inlined_call_operand.hbm [shape: f32[8,128], index: 6, kind: output, shape index: {}]
  %s7 = sld [smem:[#allocation0]]
  $region46: #{tpu_custom_call.1} parent=0
    _
  %s9 = ssub.s32 1, %s7
  %s10 = scalar_select 0, %s9, %s7
  $region1: #{tpu_custom_call.1} parent=0
    #allocation2 [shape = 'u8[8192]{0}', space=vmem, size = 0x2000, scoped, tag = 'input window, operand 2, single buffered']
    #allocation3 [shape = 's32[1]{0}', space=sflag, size = 0x4, scoped, tag = 'scoped memory for tpu_custom_call.1']
    #allocation4 [shape = 's32[1]{0}', space=sflag, size = 0x4, scoped, tag = 'scoped memory for tpu_custom_call.1']
    #allocation5 [shape = 'u8[8192]{0}', space=vmem, size = 0x2000, scoped, tag = 'input window, operand 3, single buffered']
    #allocation6 [shape = 's32[1]{0}', space=sflag, size = 0x4, scoped, tag = 'scoped memory for tpu_custom_call.1']
    #allocation7 [shape = 'u8[32768]{0}', space=vmem, size = 0x8000, scoped, tag = 'input window, operand 5, single buffered']
    #allocation8 [shape = 'u8[4096]{0}', space=vmem, size = 0x1000, scoped, tag = 'output window, operand 0, single buffered']
    %11 = vsyncpa [#allocation3], 0
    %12 = vsyncpa [#allocation6], 0
    %13 = vsyncpa [#allocation4], 0
    // Predicated region
    $region2: #{tpu_custom_call.1} parent=1 // pred_check
      _
    $region3: #{tpu_custom_call.1} parent=1 // pred_check_branch
      %15 = sbr.rel (0) target = $region5
    $region4: #{tpu_custom_call.1} parent=1 // pred_region
      _
    $region5: #{tpu_custom_call.1} parent=1 // pred_fallthru
      _
    // Predicated region
    $region6: #{tpu_custom_call.1} parent=1 // pred_check
      _
    $region7: #{tpu_custom_call.1} parent=1 // pred_check_branch
      %17 = sbr.rel (0) target = $region9
    $region8: #{tpu_custom_call.1} parent=1 // pred_region
      _
    $region9: #{tpu_custom_call.1} parent=1 // pred_fallthru
      _
    // Predicated region
    $region10: #{tpu_custom_call.1} parent=1 // pred_check
      _
    $region11: #{tpu_custom_call.1} parent=1 // pred_check_branch
      %19 = sbr.rel (0) target = $region13
    $region12: #{tpu_custom_call.1} parent=1 // pred_region
      %s21 = ssub.s32 256, 256
      %22 = vsyncadd [#allocation3], %s21
      %s23 = sshll.u32 [#allocation2], 4
      %s24 = int_to_ptr.vmem [resolvable:$true] %s23
      %29 = dma.hbm_to_vmem [thread:$0]  %s2, 256, %s24, [#allocation3], 128, 128, 8
    $region13: #{tpu_custom_call.1} parent=1 // pred_fallthru
      _
    // Predicated region
    $region14: #{tpu_custom_call.1} parent=1 // pred_check
      _
    $region15: #{tpu_custom_call.1} parent=1 // pred_check_branch
      %31 = sbr.rel (0) target = $region17
    $region16: #{tpu_custom_call.1} parent=1 // pred_region
      %s33 = ssub.s32 256, 256
      %34 = vsyncadd [#allocation6], %s33
      %s35 = sshll.u32 [#allocation5], 4
      %s36 = int_to_ptr.vmem [resolvable:$true] %s35
      %41 = dma.hbm_to_vmem [thread:$0]  %s3, 256, %s36, [#allocation6], 128, 128, 8
    $region17: #{tpu_custom_call.1} parent=1 // pred_fallthru
      _
    // Predicated region
    $region18: #{tpu_custom_call.1} parent=1 // pred_check
      _
    $region19: #{tpu_custom_call.1} parent=1 // pred_check_branch
      %43 = sbr.rel (0) target = $region21
    $region20: #{tpu_custom_call.1} parent=1 // pred_region
      _
    $region21: #{tpu_custom_call.1} parent=1 // pred_fallthru
      _
    // Predicated region
    $region22: #{tpu_custom_call.1} parent=1 // pred_check
      _
    $region23: #{tpu_custom_call.1} parent=1 // pred_check_branch
      %45 = sbr.rel (0) target = $region25
    $region24: #{tpu_custom_call.1} parent=1 // pred_region
      %s47 = ssub.s32 1024, 1024
      %48 = vsyncadd [#allocation6], %s47
      %s49 = sshll.u32 [#allocation7], 4
      %s50 = int_to_ptr.vmem [resolvable:$true] %s49
      %55 = dma.hbm_to_vmem [thread:$0]  %s5, 1024, %s50, [#allocation6], 128, 128, 8
    $region25: #{tpu_custom_call.1} parent=1 // pred_fallthru
      _
    // Predicated region
    $region26: #{tpu_custom_call.1} parent=1 // pred_check
      _
    $region27: #{tpu_custom_call.1} parent=1 // pred_check_branch
      %57 = sbr.rel (0) target = $region29
    $region28: #{tpu_custom_call.1} parent=1 // pred_region
      %58 = dma.done [#allocation3], 256
    $region29: #{tpu_custom_call.1} parent=1 // pred_fallthru
      _
    // Predicated region
    $region30: #{tpu_custom_call.1} parent=1 // pred_check
      _
    $region31: #{tpu_custom_call.1} parent=1 // pred_check_branch
      %60 = sbr.rel (0) target = $region33
    $region32: #{tpu_custom_call.1} parent=1 // pred_region
      %61 = dma.done [#allocation6], 256
    $region33: #{tpu_custom_call.1} parent=1 // pred_fallthru
      _
    // Predicated region
    $region34: #{tpu_custom_call.1} parent=1 // pred_check
      _
    $region35: #{tpu_custom_call.1} parent=1 // pred_check_branch
      %63 = sbr.rel (0) target = $region37
    $region36: #{tpu_custom_call.1} parent=1 // pred_region
      %64 = dma.done [#allocation6], 1024
    $region37: #{tpu_custom_call.1} parent=1 // pred_fallthru
      _
    %v65 = vld [vmem:[%s0] sm:$0xff]
    %v66 = vld [vmem:[%s1] sm:$0xff]
    %v67 = vlaneseq
    %v68 = vand.u32 %v67, 127
    %69 = vset.pattern.permute.xlu0 0
    %70 = vperm.xlu0 %69, %v65
    %v71 = vpop.permute.xlu0 %70
    %vm72 = vcmp.eq.s32.totalorder %v71, %v68
    %v73 = vsel %vm72, 1, 0
    %v74 = vcvt.s32.f32 %v73
    %75 = vset.pattern.permute.xlu0 0
    %76 = vperm.xlu0 %75, %v66
    %v77 = vpop.permute.xlu0 %76
    %vm78 = vcmp.eq.s32.totalorder %v77, %v68
    %v79 = vsel %vm78, 1, 0
    %v80 = vcvt.s32.f32 %v79
    %v81 = vld [vmem:[#allocation2] sm:$0xff]
    %v82 = vld [vmem:[#allocation2 + $0x8] sm:$0xff]
    %vm83 = vcmask 130048
    %v85 = vsel %vm83, %v74, 0
    %87 = vmatprep.subr.mxu0 0.0
    %88 = vmatpush1.msra.mxu0 %v81
    %89 = vmatprep.subr.mxu0 0.0
    %90 = vmatpush1.msra.mxu0 %v82
    %91 = vmatprep.subr.mxu0 0.0
    %92 = vmatpush1.msra.mxu0 0.0
    %93 = vmatprep.subr.mxu0 0.0
    %94 = vmatpush1.msra.mxu0 0.0
    %95 = vmatprep.subr.mxu0 0.0
    %96 = vmatpush1.msra.mxu0 0.0
    %97 = vmatprep.subr.mxu0 0.0
    %98 = vmatpush1.msra.mxu0 0.0
    %99 = vmatprep.subr.mxu0 0.0
    %100 = vmatpush1.msra.mxu0 0.0
    %101 = vmatprep.subr.mxu0 0.0
    %102 = vmatpush1.msra.mxu0 0.0
    %103 = vmatprep.subr.mxu0 0.0
    %104 = vmatpush1.msra.mxu0 0.0
    %105 = vmatprep.subr.mxu0 0.0
    %106 = vmatpush1.msra.mxu0 0.0
    %107 = vmatprep.subr.mxu0 0.0
    %108 = vmatpush1.msra.mxu0 0.0
    %109 = vmatprep.subr.mxu0 0.0
    %110 = vmatpush1.msra.mxu0 0.0
    %111 = vmatprep.subr.mxu0 0.0
    %112 = vmatpush1.msra.mxu0 0.0
    %113 = vmatprep.subr.mxu0 0.0
    %114 = vmatpush1.msra.mxu0 0.0
    %115 = vmatprep.subr.mxu0 0.0
    %116 = vmatpush1.msra.mxu0 0.0
    %117 = vmatprep.subr.mxu0 0.0
    %118 = vmatpush1.msra.mxu0 0.0
    %119 = vmatprep.subr.mxu0 0.0
    %120 = vmatpush1.msra.mxu0 0.0
    %121 = vmatprep.subr.mxu0 0.0
    %122 = vmatpush1.msra.mxu0 0.0
    %123 = vmatprep.subr.mxu0 0.0
    %124 = vmatpush1.msra.mxu0 0.0
    %125 = vmatprep.subr.mxu0 0.0
    %126 = vmatpush1.msra.mxu0 0.0
    %127 = vmatprep.subr.mxu0 0.0
    %128 = vmatpush1.msra.mxu0 0.0
    %129 = vmatprep.subr.mxu0 0.0
    %130 = vmatpush1.msra.mxu0 0.0
    %131 = vmatprep.subr.mxu0 0.0
    %132 = vmatpush1.msra.mxu0 0.0
    %133 = vmatprep.subr.mxu0 0.0
    %134 = vmatpush1.msra.mxu0 0.0
    %135 = vmatprep.subr.mxu0 0.0
    %136 = vmatpush1.msra.mxu0 0.0
    %137 = vmatprep.subr.mxu0 0.0
    %138 = vmatpush1.msra.mxu0 0.0
    %139 = vmatprep.subr.mxu0 0.0
    %140 = vmatpush1.msra.mxu0 0.0
    %141 = vmatprep.subr.mxu0 0.0
    %142 = vmatpush1.msra.mxu0 0.0
    %143 = vmatprep.subr.mxu0 0.0
    %144 = vmatpush1.msra.mxu0 0.0
    %145 = vmatprep.subr.mxu0 0.0
    %146 = vmatpush1.msra.mxu0 0.0
    %147 = vmatprep.subr.mxu0 0.0
    %148 = vmatpush1.msra.mxu0 0.0
    %149 = vmatprep.subr.mxu0 0.0
    %150 = vmatpush1.msra.mxu0 0.0
    %151 = vmatprep.mubr.f32.mxu0 0.0
    %152 = vmatmul.mubr.f32.gmra.mrb[0].mxu0 %v85
    %v153 = vpop.f32.mrb[0].mxu0
    %v154 = vadd.f32 0.0, %v153
    %v155 = vpop.f32.mrb[0].mxu0
    %156 = vdwg.mxu0
    %v157 = vld [vmem:[#allocation5] sm:$0xff]
    %v158 = vld [vmem:[#allocation5 + $0x8] sm:$0xff]
    %v160 = vsel %vm83, %v80, 0
    %162 = vmatprep.subr.mxu0 0.0
    %163 = vmatpush1.msra.mxu0 %v157
    %164 = vmatprep.subr.mxu0 0.0
    %165 = vmatpush1.msra.mxu0 %v158
    %166 = vmatprep.subr.mxu0 0.0
    %167 = vmatpush1.msra.mxu0 0.0
    %168 = vmatprep.subr.mxu0 0.0
    %169 = vmatpush1.msra.mxu0 0.0
    %170 = vmatprep.subr.mxu0 0.0
    %171 = vmatpush1.msra.mxu0 0.0
    %172 = vmatprep.subr.mxu0 0.0
    %173 = vmatpush1.msra.mxu0 0.0
    %174 = vmatprep.subr.mxu0 0.0
    %175 = vmatpush1.msra.mxu0 0.0
    %176 = vmatprep.subr.mxu0 0.0
    %177 = vmatpush1.msra.mxu0 0.0
    %178 = vmatprep.subr.mxu0 0.0
    %179 = vmatpush1.msra.mxu0 0.0
    %180 = vmatprep.subr.mxu0 0.0
    %181 = vmatpush1.msra.mxu0 0.0
    %182 = vmatprep.subr.mxu0 0.0
    %183 = vmatpush1.msra.mxu0 0.0
    %184 = vmatprep.subr.mxu0 0.0
    %185 = vmatpush1.msra.mxu0 0.0
    %186 = vmatprep.subr.mxu0 0.0
    %187 = vmatpush1.msra.mxu0 0.0
    %188 = vmatprep.subr.mxu0 0.0
    %189 = vmatpush1.msra.mxu0 0.0
    %190 = vmatprep.subr.mxu0 0.0
    %191 = vmatpush1.msra.mxu0 0.0
    %192 = vmatprep.subr.mxu0 0.0
    %193 = vmatpush1.msra.mxu0 0.0
    %194 = vmatprep.subr.mxu0 0.0
    %195 = vmatpush1.msra.mxu0 0.0
    %196 = vmatprep.subr.mxu0 0.0
    %197 = vmatpush1.msra.mxu0 0.0
    %198 = vmatprep.subr.mxu0 0.0
    %199 = vmatpush1.msra.mxu0 0.0
    %200 = vmatprep.subr.mxu0 0.0
    %201 = vmatpush1.msra.mxu0 0.0
    %202 = vmatprep.subr.mxu0 0.0
    %203 = vmatpush1.msra.mxu0 0.0
    %204 = vmatprep.subr.mxu0 0.0
    %205 = vmatpush1.msra.mxu0 0.0
    %206 = vmatprep.subr.mxu0 0.0
    %207 = vmatpush1.msra.mxu0 0.0
    %208 = vmatprep.subr.mxu0 0.0
    %209 = vmatpush1.msra.mxu0 0.0
    %210 = vmatprep.subr.mxu0 0.0
    %211 = vmatpush1.msra.mxu0 0.0
    %212 = vmatprep.subr.mxu0 0.0
    %213 = vmatpush1.msra.mxu0 0.0
    %214 = vmatprep.subr.mxu0 0.0
    %215 = vmatpush1.msra.mxu0 0.0
    %216 = vmatprep.subr.mxu0 0.0
    %217 = vmatpush1.msra.mxu0 0.0
    %218 = vmatprep.subr.mxu0 0.0
    %219 = vmatpush1.msra.mxu0 0.0
    %220 = vmatprep.subr.mxu0 0.0
    %221 = vmatpush1.msra.mxu0 0.0
    %222 = vmatprep.subr.mxu0 0.0
    %223 = vmatpush1.msra.mxu0 0.0
    %224 = vmatprep.subr.mxu0 0.0
    %225 = vmatpush1.msra.mxu0 0.0
    %226 = vmatprep.mubr.f32.mxu0 0.0
    %227 = vmatmul.mubr.f32.gmra.mrb[0].mxu0 %v160
    %v228 = vpop.f32.mrb[0].mxu0
    %v229 = vadd.f32 0.0, %v228
    %v230 = vpop.f32.mrb[0].mxu0
    %231 = vdwg.mxu0
    %v232 = vld [vmem:[%s4] sm:$0xff]
    %v233 = vld [vmem:[%s4 + $0x8] sm:$0xff]
    %v234 = vld [vmem:[%s4 + $0x10] sm:$0xff]
    %v235 = vld [vmem:[%s4 + $0x18] sm:$0xff]
    %vm236 = vcmask 261120
    %v238 = vsel %vm236, %v154, 0
    %240 = vmatprep.subr.mxu0 0.0
    %241 = vmatpush1.msra.mxu0 %v232
    %242 = vmatprep.subr.mxu0 0.0
    %243 = vmatpush1.msra.mxu0 %v233
    %244 = vmatprep.subr.mxu0 0.0
    %245 = vmatpush1.msra.mxu0 %v234
    %246 = vmatprep.subr.mxu0 0.0
    %247 = vmatpush1.msra.mxu0 %v235
    %248 = vmatprep.subr.mxu0 0.0
    %249 = vmatpush1.msra.mxu0 0.0
    %250 = vmatprep.subr.mxu0 0.0
    %251 = vmatpush1.msra.mxu0 0.0
    %252 = vmatprep.subr.mxu0 0.0
    %253 = vmatpush1.msra.mxu0 0.0
    %254 = vmatprep.subr.mxu0 0.0
    %255 = vmatpush1.msra.mxu0 0.0
    %256 = vmatprep.subr.mxu0 0.0
    %257 = vmatpush1.msra.mxu0 0.0
    %258 = vmatprep.subr.mxu0 0.0
    %259 = vmatpush1.msra.mxu0 0.0
    %260 = vmatprep.subr.mxu0 0.0
    %261 = vmatpush1.msra.mxu0 0.0
    %262 = vmatprep.subr.mxu0 0.0
    %263 = vmatpush1.msra.mxu0 0.0
    %264 = vmatprep.subr.mxu0 0.0
    %265 = vmatpush1.msra.mxu0 0.0
    %266 = vmatprep.subr.mxu0 0.0
    %267 = vmatpush1.msra.mxu0 0.0
    %268 = vmatprep.subr.mxu0 0.0
    %269 = vmatpush1.msra.mxu0 0.0
    %270 = vmatprep.subr.mxu0 0.0
    %271 = vmatpush1.msra.mxu0 0.0
    %272 = vmatprep.subr.mxu0 0.0
    %273 = vmatpush1.msra.mxu0 0.0
    %274 = vmatprep.subr.mxu0 0.0
    %275 = vmatpush1.msra.mxu0 0.0
    %276 = vmatprep.subr.mxu0 0.0
    %277 = vmatpush1.msra.mxu0 0.0
    %278 = vmatprep.subr.mxu0 0.0
    %279 = vmatpush1.msra.mxu0 0.0
    %280 = vmatprep.subr.mxu0 0.0
    %281 = vmatpush1.msra.mxu0 0.0
    %282 = vmatprep.subr.mxu0 0.0
    %283 = vmatpush1.msra.mxu0 0.0
    %284 = vmatprep.subr.mxu0 0.0
    %285 = vmatpush1.msra.mxu0 0.0
    %286 = vmatprep.subr.mxu0 0.0
    %287 = vmatpush1.msra.mxu0 0.0
    %288 = vmatprep.subr.mxu0 0.0
    %289 = vmatpush1.msra.mxu0 0.0
    %290 = vmatprep.subr.mxu0 0.0
    %291 = vmatpush1.msra.mxu0 0.0
    %292 = vmatprep.subr.mxu0 0.0
    %293 = vmatpush1.msra.mxu0 0.0
    %294 = vmatprep.subr.mxu0 0.0
    %295 = vmatpush1.msra.mxu0 0.0
    %296 = vmatprep.subr.mxu0 0.0
    %297 = vmatpush1.msra.mxu0 0.0
    %298 = vmatprep.subr.mxu0 0.0
    %299 = vmatpush1.msra.mxu0 0.0
    %300 = vmatprep.subr.mxu0 0.0
    %301 = vmatpush1.msra.mxu0 0.0
    %302 = vmatprep.subr.mxu0 0.0
    %303 = vmatpush1.msra.mxu0 0.0
    %304 = vmatprep.mubr.f32.mxu0 0.0
    %305 = vmatmul.mubr.f32.gmra.mrb[0].mxu0 %v238
    %v306 = vpop.f32.mrb[0].mxu0
    %v307 = vadd.f32 0.0, %v306
    %v308 = vpop.f32.mrb[0].mxu0
    %309 = vdwg.mxu0
    %311 = vrot.lane.b32.xlu0 %v229, 32
    %v312 = vpop.permute.xlu0 %311
    %v314 = vsel %vm236, %v229, %v312
    %v315 = vmul.f32 %v307, %v314
    %v316 = vld [vmem:[#allocation7] sm:$0xff]
    %v317 = vld [vmem:[#allocation7 + $0x8] sm:$0xff]
    %v318 = vld [vmem:[#allocation7 + $0x10] sm:$0xff]
    %v319 = vld [vmem:[#allocation7 + $0x18] sm:$0xff]
    %v320 = vld [vmem:[#allocation7 + $0x20] sm:$0xff]
    %v321 = vld [vmem:[#allocation7 + $0x28] sm:$0xff]
    %v322 = vld [vmem:[#allocation7 + $0x30] sm:$0xff]
    %v323 = vld [vmem:[#allocation7 + $0x38] sm:$0xff]
    %vm324 = vcmask 523264
    %v326 = vsel %vm324, %v315, 0
    %328 = vmatprep.subr.mxu0 0.0
    %329 = vmatpush1.msra.mxu0 %v316
    %330 = vmatprep.subr.mxu0 0.0
    %331 = vmatpush1.msra.mxu0 %v317
    %332 = vmatprep.subr.mxu0 0.0
    %333 = vmatpush1.msra.mxu0 %v318
    %334 = vmatprep.subr.mxu0 0.0
    %335 = vmatpush1.msra.mxu0 %v319
    %336 = vmatprep.subr.mxu0 0.0
    %337 = vmatpush1.msra.mxu0 %v320
    %338 = vmatprep.subr.mxu0 0.0
    %339 = vmatpush1.msra.mxu0 %v321
    %340 = vmatprep.subr.mxu0 0.0
    %341 = vmatpush1.msra.mxu0 %v322
    %342 = vmatprep.subr.mxu0 0.0
    %343 = vmatpush1.msra.mxu0 %v323
    %344 = vmatprep.subr.mxu0 0.0
    %345 = vmatpush1.msra.mxu0 0.0
    %346 = vmatprep.subr.mxu0 0.0
    %347 = vmatpush1.msra.mxu0 0.0
    %348 = vmatprep.subr.mxu0 0.0
    %349 = vmatpush1.msra.mxu0 0.0
    %350 = vmatprep.subr.mxu0 0.0
    %351 = vmatpush1.msra.mxu0 0.0
    %352 = vmatprep.subr.mxu0 0.0
    %353 = vmatpush1.msra.mxu0 0.0
    %354 = vmatprep.subr.mxu0 0.0
    %355 = vmatpush1.msra.mxu0 0.0
    %356 = vmatprep.subr.mxu0 0.0
    %357 = vmatpush1.msra.mxu0 0.0
    %358 = vmatprep.subr.mxu0 0.0
    %359 = vmatpush1.msra.mxu0 0.0
    %360 = vmatprep.subr.mxu0 0.0
    %361 = vmatpush1.msra.mxu0 0.0
    %362 = vmatprep.subr.mxu0 0.0
    %363 = vmatpush1.msra.mxu0 0.0
    %364 = vmatprep.subr.mxu0 0.0
    %365 = vmatpush1.msra.mxu0 0.0
    %366 = vmatprep.subr.mxu0 0.0
    %367 = vmatpush1.msra.mxu0 0.0
    %368 = vmatprep.subr.mxu0 0.0
    %369 = vmatpush1.msra.mxu0 0.0
    %370 = vmatprep.subr.mxu0 0.0
    %371 = vmatpush1.msra.mxu0 0.0
    %372 = vmatprep.subr.mxu0 0.0
    %373 = vmatpush1.msra.mxu0 0.0
    %374 = vmatprep.subr.mxu0 0.0
    %375 = vmatpush1.msra.mxu0 0.0
    %376 = vmatprep.subr.mxu0 0.0
    %377 = vmatpush1.msra.mxu0 0.0
    %378 = vmatprep.subr.mxu0 0.0
    %379 = vmatpush1.msra.mxu0 0.0
    %380 = vmatprep.subr.mxu0 0.0
    %381 = vmatpush1.msra.mxu0 0.0
    %382 = vmatprep.subr.mxu0 0.0
    %383 = vmatpush1.msra.mxu0 0.0
    %384 = vmatprep.subr.mxu0 0.0
    %385 = vmatpush1.msra.mxu0 0.0
    %386 = vmatprep.subr.mxu0 0.0
    %387 = vmatpush1.msra.mxu0 0.0
    %388 = vmatprep.subr.mxu0 0.0
    %389 = vmatpush1.msra.mxu0 0.0
    %390 = vmatprep.subr.mxu0 0.0
    %391 = vmatpush1.msra.mxu0 0.0
    %392 = vmatprep.mubr.f32.mxu0 0.0
    %393 = vmatmul.mubr.f32.gmra.mrb[0].mxu0 %v326
    %v394 = vpop.f32.mrb[0].mxu0
    %v395 = vadd.f32 0.0, %v394
    %v396 = vpop.f32.mrb[0].mxu0
    %397 = vdwg.mxu0
    %v398 = vmax.f32 %v395, 0.0
    %399 = vst [vmem:[#allocation8] sm:$0xff] %v398
    // Predicated region
    $region38: #{tpu_custom_call.1} parent=1 // pred_check
      _
    $region39: #{tpu_custom_call.1} parent=1 // pred_check_branch
      %401 = sbr.rel (0) target = $region41
    $region40: #{tpu_custom_call.1} parent=1 // pred_region
      %s403 = ssub.s32 128, 128
      %404 = vsyncadd [#allocation4], %s403
      %s406 = sshll.u32 [#allocation8], 4
      %s407 = int_to_ptr.vmem [resolvable:$true] %s406
      %409 = dma.vmem_to_hbm [thread:$0]  %s407, 128, %s6, [#allocation4]
    $region41: #{tpu_custom_call.1} parent=1 // pred_fallthru
      _
    // Predicated region
    $region42: #{tpu_custom_call.1} parent=1 // pred_check
      _
    $region43: #{tpu_custom_call.1} parent=1 // pred_check_branch
      %411 = sbr.rel (0) target = $region45
    $region44: #{tpu_custom_call.1} parent=1 // pred_region
      %412 = dma.done [#allocation4], 128
    $region45: #{tpu_custom_call.1} parent=1 // pred_fallthru
      _
    %413 = vsyncpa [#allocation3], 1
    %414 = vsyncpa [#allocation6], 1
    %415 = vsyncpa [#allocation4], 1

</llo_original>
